<compile_context>
chip_gen: v6e
topology: v6e:2x2x1
jax: 0.10.0
libtpu: 0.0.40
codegen_flags: <defaults>
</compile_context>

<pallas_src>
import jax
import jax.numpy as jnp
from jax.experimental import pallas as pl
from jax.experimental.pallas import tpu as pltpu


def impact_kernel(im_ref, g_ref, v_ref, nb_ref, out_ref):
    """One block of TB batch rows (rows on the 128-lane axis).

    im_ref : (D, M, TB)  item response embeddings of this row's item (transposed)
    g_ref  : (D, D, TB)  per-row Gram matrix  G = W_t W_t^T
    v_ref  : (D, TB)     per-row vector       v = W_t u
    nb_ref : (1, TB)     nb_modalities[item]  (int32)
    out_ref: (1, TB)     responses (float32)
    """
    im = im_ref[...].astype(jnp.float32)   # (D, M, TB)
    g = g_ref[...].astype(jnp.float32)     # (D, D, TB)
    v = v_ref[...].astype(jnp.float32)     # (D, TB)
    nb = nb_ref[...]                       # (1, TB) int32

    D, M, TB = im.shape

    # s[m, b] = sum_{d,e} G[d,e,b] * im[d,m,b] * im[e,m,b] - 2 * sum_d v[d,b] * im[d,m,b]
    # (= ||u - e_m||^2 - ||u||^2; the dropped constant does not change the argmin.)
    # D == 3, so this unrolls to 12 broadcast FMAs on dense (M, TB) tiles — no MXU.
    s = jnp.zeros((M, TB), jnp.float32)
    for d in range(D):
        im_d = im[d]                                        # (M, TB)
        s = s - 2.0 * v[d:d + 1, :] * im_d                  # linear term
        for e in range(D):
            s = s + g[d, e:e + 1, :] * im_d * im[e]         # quadratic term

    # Validity mask rebuilt from nb_modalities: modality slots 1..nb are valid
    # (same effect as adding the module's +inf mask buffer).
    m_ids = jax.lax.broadcasted_iota(jnp.int32, (M, TB), 0)
    valid = jnp.logical_and(m_ids >= 1, m_ids <= nb)        # (M, TB)
    s = jnp.where(valid, s, jnp.inf)

    # First-occurrence argmin over the modality (sublane) axis — matches torch.argmin.
    min_val = jnp.min(s, axis=0, keepdims=True)             # (1, TB)
    cand = jnp.where(s == min_val, m_ids, jnp.int32(M))
    am = jnp.min(cand, axis=0, keepdims=True)               # (1, TB) int32

    # mod_to_resp: (idx - 1) / (nb - 1) + 1, lane-dense store of the whole TB block.
    nb_f = nb.astype(jnp.float32)
    out_ref[...] = (am.astype(jnp.float32) - 1.0) / (nb_f - 1.0) + 1.0


def impact_forward(user_ids, item_ids, concept_ids, params, *, tb=128):
    users_emb = params["users_emb"]                       # (user_n, C)
    item_resp_emb = params["item_response_embeddings"]    # (item_n*M, D)
    W = params["W"]                                       # (concept_n, D, C)
    nb_modalities = params["nb_modalities"]               # (item_n,) int32

    item_n, M = params["mask"].shape
    D = item_resp_emb.shape[1]
    B = user_ids.shape[0]
    assert tb % 128 == 0, "TB must be a multiple of 128 for lane-dense blocks"

    # ---- XLA prologue: per-row gathers + Gram-form precomputation (tiny tensors) ----
    # G_c = W_c @ W_c^T  (concept_n, D, D)
    G_table = jnp.einsum("cdk,cek->cde", W, W)
    g = G_table[concept_ids]                               # (B, D, D)
    W_t = W[concept_ids]                                   # (B, D, C)
    u = users_emb[user_ids]                                # (B, C)
    v = jnp.einsum("bdc,bc->bd", W_t, u)                   # (B, D)  = W_t u
    # Relies on im_idx[i, j] == i*M + j (how the module builds it), so the M response
    # rows of an item are contiguous.
    im = item_resp_emb.reshape(item_n, M, D)[item_ids]     # (B, M, D)
    nb = nb_modalities[item_ids].astype(jnp.int32)         # (B,)

    # ---- pad batch to a multiple of TB and put the batch axis on lanes ----
    n_blk = pl.cdiv(B, tb)
    b_pad = n_blk * tb
    pad = b_pad - B
    im_p = jnp.pad(im, ((0, pad), (0, 0), (0, 0)))
    g_p = jnp.pad(g, ((0, pad), (0, 0), (0, 0)))
    v_p = jnp.pad(v, ((0, pad), (0, 0)))
    nb_p = jnp.pad(nb, ((0, pad),), constant_values=2)     # benign padding (discarded)

    imX = jnp.transpose(im_p, (2, 1, 0)).astype(jnp.float32)   # (D, M, B_pad)
    gX = jnp.transpose(g_p, (1, 2, 0)).astype(jnp.float32)     # (D, D, B_pad)
    vX = jnp.transpose(v_p, (1, 0)).astype(jnp.float32)        # (D, B_pad)
    nbX = nb_p.reshape(1, b_pad)                                # (1, B_pad) int32

    out = pl.pallas_call(
        impact_kernel,
        out_shape=jax.ShapeDtypeStruct((1, b_pad), jnp.float32),
        grid_spec=pl.GridSpec(
            grid=(n_blk,),
            in_specs=[
                pl.BlockSpec((D, M, tb), lambda i: (0, 0, i)),
                pl.BlockSpec((D, D, tb), lambda i: (0, 0, i)),
                pl.BlockSpec((D, tb), lambda i: (0, i)),
                pl.BlockSpec((1, tb), lambda i: (0, i)),
            ],
            out_specs=pl.BlockSpec((1, tb), lambda i: (0, i)),
        ),
        compiler_params=pltpu.CompilerParams(
            dimension_semantics=("parallel",)),
    )(imX, gX, vX, nbX)

    return out[0, :B]


def reference_forward(user_ids, item_ids, concept_ids, params):
    """Pure-jnp reference mirroring the PyTorch forward. Also returns masked distances."""
    W_t = params["W"][concept_ids]
    im_emb_prime = params["item_response_embeddings"][params["im_idx"][item_ids]]
    im_emb = jnp.einsum("bmd,bdc->bmc", im_emb_prime, W_t)
    u_emb = params["users_emb"][user_ids]
    diff = u_emb[:, None, :] - im_emb
    p_uim = jnp.sum(diff ** 2, axis=2)
    p_masked = p_uim + params["mask"][item_ids]
    am = jnp.argmin(p_masked, axis=1)
    nb = params["nb_modalities"][item_ids]
    resp = (am.astype(jnp.float32) - 1.0) / (nb.astype(jnp.float32) - 1.0) + 1.0
    return resp, p_masked


def make_params(key, user_n, item_n, concept_n, d_in, nb_mod_max):
    """Synthetic, deterministic parameters with the shapes implied by __init__."""
    # TODO(synk): the module's __init__-time statistics (nb_modalities/mask from the
    # training log tensor) are host-side setup; synthesized randomly here.
    M = nb_mod_max + 2  # nb_mod_max_plus_sent
    k0, k1, k2, k3 = jax.random.split(key, 4)

    users_emb = jax.random.normal(k0, (user_n, concept_n), jnp.float32)
    item_resp_emb = jax.random.normal(k1, (item_n * M, d_in), jnp.float32)

    # W: xavier-uniform-like init, then L2-normalized over dims (1, 2).
    W = jax.random.normal(k2, (concept_n, d_in, concept_n), jnp.float32)
    W = W / jnp.sqrt(jnp.sum(W * W, axis=(1, 2), keepdims=True) + 1e-12)

    # nb_modalities in [2, nb_mod_max]; mask is +inf except slots 1..nb_mod.
    nb_modalities = jax.random.randint(k3, (item_n,), 2, nb_mod_max + 1,
                                       dtype=jnp.int32)
    cols = jnp.arange(M, dtype=jnp.int32)[None, :]
    valid = (cols >= 1) & (cols <= nb_modalities[:, None])
    mask = jnp.where(valid, 0.0, jnp.inf).astype(jnp.float32)

    im_idx = (jnp.arange(item_n, dtype=jnp.int32)[:, None] * M
              + jnp.arange(M, dtype=jnp.int32)[None, :])

    return {
        "users_emb": users_emb,
        "item_response_embeddings": item_resp_emb,
        "W": W,
        "nb_modalities": nb_modalities,
        "mask": mask,
        "im_idx": im_idx,
    }


if __name__ == "__main__":
    key = jax.random.PRNGKey(0)
    user_n, item_n, concept_n = 6, 10, 32
    d_in, nb_mod_max = 3, 12
    B = 300                     # 3 grid steps at TB=128 (padded to 384), exercises padding

    k_params, k_u, k_i, k_c = jax.random.split(key, 4)
    params = make_params(k_params, user_n, item_n, concept_n, d_in, nb_mod_max)

    user_ids = jax.random.randint(k_u, (B,), 0, user_n, dtype=jnp.int32)
    item_ids = jax.random.randint(k_i, (B,), 0, item_n, dtype=jnp.int32)
    concept_ids = jax.random.randint(k_c, (B,), 0, concept_n, dtype=jnp.int32)

    out = impact_forward(user_ids, item_ids, concept_ids, params)
    out = jax.block_until_ready(out)
    assert out.shape == (B,)

    ref, p_masked = reference_forward(user_ids, item_ids, concept_ids, params)
    mismatch = ~jnp.isclose(out, ref, atol=1e-5)
    if bool(jnp.any(mismatch)):
        # The Gram-form distance rounds differently from sum((u-e)^2); an argmin may only
        # legitimately differ at a numerical tie.  Verify every mismatching row is such a
        # tie: the kernel's chosen modality attains the reference minimum distance.
        nb = params["nb_modalities"][item_ids].astype(jnp.float32)
        idx_k = (jnp.round((out - 1.0) * (nb - 1.0)) + 1.0).astype(jnp.int32)
        d_k = jnp.take_along_axis(p_masked, idx_k[:, None], axis=1)[:, 0]
        d_min = jnp.min(p_masked, axis=1)
        tie_ok = jnp.abs(d_k - d_min) <= 1e-4 * (1.0 + jnp.abs(d_min))
        assert bool(jnp.all(jnp.where(mismatch, tie_ok, True))), (out, ref)

    print("KERNEL_OK")
</pallas_src>

<mosaic_0001>
module attributes {stable_mosaic.version = 11 : i64} {
  func.func @impact_kernel(%arg0: i32, %arg1: memref<3x14x128xf32, #tpu.memory_space<vmem>>, %arg2: memref<3x3x128xf32, #tpu.memory_space<vmem>>, %arg3: memref<3x128xf32, #tpu.memory_space<vmem>>, %arg4: memref<1x128xi32, #tpu.memory_space<vmem>>, %arg5: memref<1x128xf32, #tpu.memory_space<vmem>>) attributes {dimension_semantics = [#tpu.dimension_semantics<parallel>], iteration_bounds = array<i64: 3>, scalar_prefetch = 0 : i64, scratch_operands = 0 : i64, tpu.core_type = #tpu.core_type<tc>, window_params = [{transform_indices = @transform_0, window_bounds = array<i64: 3, 14, 128>}, {transform_indices = @transform_1, window_bounds = array<i64: 3, 3, 128>}, {transform_indices = @transform_2, window_bounds = array<i64: 3, 128>}, {transform_indices = @transform_3, window_bounds = array<i64: 1, 128>}, {transform_indices = @transform_4, window_bounds = array<i64: 1, 128>}]} {
    %c0 = arith.constant 0 : index
    %c0_0 = arith.constant 0 : index
    %c0_1 = arith.constant 0 : index
    %0 = vector.load %arg1[%c0, %c0_0, %c0_1] : memref<3x14x128xf32, #tpu.memory_space<vmem>>, vector<3x14x128xf32>
    %c0_2 = arith.constant 0 : index
    %c0_3 = arith.constant 0 : index
    %c0_4 = arith.constant 0 : index
    %1 = vector.load %arg2[%c0_2, %c0_3, %c0_4] : memref<3x3x128xf32, #tpu.memory_space<vmem>>, vector<3x3x128xf32>
    %c0_5 = arith.constant 0 : index
    %c0_6 = arith.constant 0 : index
    %2 = vector.load %arg3[%c0_5, %c0_6] : memref<3x128xf32, #tpu.memory_space<vmem>>, vector<3x128xf32>
    %c0_7 = arith.constant 0 : index
    %c0_8 = arith.constant 0 : index
    %3 = vector.load %arg4[%c0_7, %c0_8] : memref<1x128xi32, #tpu.memory_space<vmem>>, vector<1x128xi32>
    %cst = arith.constant 0.000000e+00 : f32
    %4 = vector.broadcast %cst : f32 to vector<14x128xf32>
    %5 = vector.extract_strided_slice %0 {offsets = [0, 0, 0], sizes = [1, 14, 128], strides = [1, 1, 1]} : vector<3x14x128xf32> to vector<1x14x128xf32>
    %6 = vector.shape_cast %5 : vector<1x14x128xf32> to vector<14x128xf32>
    %7 = vector.extract_strided_slice %2 {offsets = [0, 0], sizes = [1, 128], strides = [1, 1]} : vector<3x128xf32> to vector<1x128xf32>
    %cst_9 = arith.constant 2.000000e+00 : f32
    %8 = vector.broadcast %cst_9 : f32 to vector<1x128xf32>
    %9 = arith.mulf %8, %7 : vector<1x128xf32>
    %10 = vector.broadcast %9 : vector<1x128xf32> to vector<14x128xf32>
    %11 = arith.mulf %10, %6 : vector<14x128xf32>
    %12 = arith.subf %4, %11 : vector<14x128xf32>
    %13 = vector.extract_strided_slice %1 {offsets = [0, 0, 0], sizes = [1, 1, 128], strides = [1, 1, 1]} : vector<3x3x128xf32> to vector<1x1x128xf32>
    %14 = vector.shape_cast %13 : vector<1x1x128xf32> to vector<1x128xf32>
    %15 = vector.broadcast %14 : vector<1x128xf32> to vector<14x128xf32>
    %16 = arith.mulf %15, %6 : vector<14x128xf32>
    %17 = vector.extract_strided_slice %0 {offsets = [0, 0, 0], sizes = [1, 14, 128], strides = [1, 1, 1]} : vector<3x14x128xf32> to vector<1x14x128xf32>
    %18 = vector.shape_cast %17 : vector<1x14x128xf32> to vector<14x128xf32>
    %19 = arith.mulf %16, %18 : vector<14x128xf32>
    %20 = arith.addf %12, %19 : vector<14x128xf32>
    %21 = vector.extract_strided_slice %1 {offsets = [0, 1, 0], sizes = [1, 1, 128], strides = [1, 1, 1]} : vector<3x3x128xf32> to vector<1x1x128xf32>
    %22 = vector.shape_cast %21 : vector<1x1x128xf32> to vector<1x128xf32>
    %23 = vector.broadcast %22 : vector<1x128xf32> to vector<14x128xf32>
    %24 = arith.mulf %23, %6 : vector<14x128xf32>
    %25 = vector.extract_strided_slice %0 {offsets = [1, 0, 0], sizes = [1, 14, 128], strides = [1, 1, 1]} : vector<3x14x128xf32> to vector<1x14x128xf32>
    %26 = vector.shape_cast %25 : vector<1x14x128xf32> to vector<14x128xf32>
    %27 = arith.mulf %24, %26 : vector<14x128xf32>
    %28 = arith.addf %20, %27 : vector<14x128xf32>
    %29 = vector.extract_strided_slice %1 {offsets = [0, 2, 0], sizes = [1, 1, 128], strides = [1, 1, 1]} : vector<3x3x128xf32> to vector<1x1x128xf32>
    %30 = vector.shape_cast %29 : vector<1x1x128xf32> to vector<1x128xf32>
    %31 = vector.broadcast %30 : vector<1x128xf32> to vector<14x128xf32>
    %32 = arith.mulf %31, %6 : vector<14x128xf32>
    %33 = vector.extract_strided_slice %0 {offsets = [2, 0, 0], sizes = [1, 14, 128], strides = [1, 1, 1]} : vector<3x14x128xf32> to vector<1x14x128xf32>
    %34 = vector.shape_cast %33 : vector<1x14x128xf32> to vector<14x128xf32>
    %35 = arith.mulf %32, %34 : vector<14x128xf32>
    %36 = arith.addf %28, %35 : vector<14x128xf32>
    %37 = vector.extract_strided_slice %0 {offsets = [1, 0, 0], sizes = [1, 14, 128], strides = [1, 1, 1]} : vector<3x14x128xf32> to vector<1x14x128xf32>
    %38 = vector.shape_cast %37 : vector<1x14x128xf32> to vector<14x128xf32>
    %39 = vector.extract_strided_slice %2 {offsets = [1, 0], sizes = [1, 128], strides = [1, 1]} : vector<3x128xf32> to vector<1x128xf32>
    %cst_10 = arith.constant 2.000000e+00 : f32
    %40 = vector.broadcast %cst_10 : f32 to vector<1x128xf32>
    %41 = arith.mulf %40, %39 : vector<1x128xf32>
    %42 = vector.broadcast %41 : vector<1x128xf32> to vector<14x128xf32>
    %43 = arith.mulf %42, %38 : vector<14x128xf32>
    %44 = arith.subf %36, %43 : vector<14x128xf32>
    %45 = vector.extract_strided_slice %1 {offsets = [1, 0, 0], sizes = [1, 1, 128], strides = [1, 1, 1]} : vector<3x3x128xf32> to vector<1x1x128xf32>
    %46 = vector.shape_cast %45 : vector<1x1x128xf32> to vector<1x128xf32>
    %47 = vector.broadcast %46 : vector<1x128xf32> to vector<14x128xf32>
    %48 = arith.mulf %47, %38 : vector<14x128xf32>
    %49 = vector.extract_strided_slice %0 {offsets = [0, 0, 0], sizes = [1, 14, 128], strides = [1, 1, 1]} : vector<3x14x128xf32> to vector<1x14x128xf32>
    %50 = vector.shape_cast %49 : vector<1x14x128xf32> to vector<14x128xf32>
    %51 = arith.mulf %48, %50 : vector<14x128xf32>
    %52 = arith.addf %44, %51 : vector<14x128xf32>
    %53 = vector.extract_strided_slice %1 {offsets = [1, 1, 0], sizes = [1, 1, 128], strides = [1, 1, 1]} : vector<3x3x128xf32> to vector<1x1x128xf32>
    %54 = vector.shape_cast %53 : vector<1x1x128xf32> to vector<1x128xf32>
    %55 = vector.broadcast %54 : vector<1x128xf32> to vector<14x128xf32>
    %56 = arith.mulf %55, %38 : vector<14x128xf32>
    %57 = vector.extract_strided_slice %0 {offsets = [1, 0, 0], sizes = [1, 14, 128], strides = [1, 1, 1]} : vector<3x14x128xf32> to vector<1x14x128xf32>
    %58 = vector.shape_cast %57 : vector<1x14x128xf32> to vector<14x128xf32>
    %59 = arith.mulf %56, %58 : vector<14x128xf32>
    %60 = arith.addf %52, %59 : vector<14x128xf32>
    %61 = vector.extract_strided_slice %1 {offsets = [1, 2, 0], sizes = [1, 1, 128], strides = [1, 1, 1]} : vector<3x3x128xf32> to vector<1x1x128xf32>
    %62 = vector.shape_cast %61 : vector<1x1x128xf32> to vector<1x128xf32>
    %63 = vector.broadcast %62 : vector<1x128xf32> to vector<14x128xf32>
    %64 = arith.mulf %63, %38 : vector<14x128xf32>
    %65 = vector.extract_strided_slice %0 {offsets = [2, 0, 0], sizes = [1, 14, 128], strides = [1, 1, 1]} : vector<3x14x128xf32> to vector<1x14x128xf32>
    %66 = vector.shape_cast %65 : vector<1x14x128xf32> to vector<14x128xf32>
    %67 = arith.mulf %64, %66 : vector<14x128xf32>
    %68 = arith.addf %60, %67 : vector<14x128xf32>
    %69 = vector.extract_strided_slice %0 {offsets = [2, 0, 0], sizes = [1, 14, 128], strides = [1, 1, 1]} : vector<3x14x128xf32> to vector<1x14x128xf32>
    %70 = vector.shape_cast %69 : vector<1x14x128xf32> to vector<14x128xf32>
    %71 = vector.extract_strided_slice %2 {offsets = [2, 0], sizes = [1, 128], strides = [1, 1]} : vector<3x128xf32> to vector<1x128xf32>
    %cst_11 = arith.constant 2.000000e+00 : f32
    %72 = vector.broadcast %cst_11 : f32 to vector<1x128xf32>
    %73 = arith.mulf %72, %71 : vector<1x128xf32>
    %74 = vector.broadcast %73 : vector<1x128xf32> to vector<14x128xf32>
    %75 = arith.mulf %74, %70 : vector<14x128xf32>
    %76 = arith.subf %68, %75 : vector<14x128xf32>
    %77 = vector.extract_strided_slice %1 {offsets = [2, 0, 0], sizes = [1, 1, 128], strides = [1, 1, 1]} : vector<3x3x128xf32> to vector<1x1x128xf32>
    %78 = vector.shape_cast %77 : vector<1x1x128xf32> to vector<1x128xf32>
    %79 = vector.broadcast %78 : vector<1x128xf32> to vector<14x128xf32>
    %80 = arith.mulf %79, %70 : vector<14x128xf32>
    %81 = vector.extract_strided_slice %0 {offsets = [0, 0, 0], sizes = [1, 14, 128], strides = [1, 1, 1]} : vector<3x14x128xf32> to vector<1x14x128xf32>
    %82 = vector.shape_cast %81 : vector<1x14x128xf32> to vector<14x128xf32>
    %83 = arith.mulf %80, %82 : vector<14x128xf32>
    %84 = arith.addf %76, %83 : vector<14x128xf32>
    %85 = vector.extract_strided_slice %1 {offsets = [2, 1, 0], sizes = [1, 1, 128], strides = [1, 1, 1]} : vector<3x3x128xf32> to vector<1x1x128xf32>
    %86 = vector.shape_cast %85 : vector<1x1x128xf32> to vector<1x128xf32>
    %87 = vector.broadcast %86 : vector<1x128xf32> to vector<14x128xf32>
    %88 = arith.mulf %87, %70 : vector<14x128xf32>
    %89 = vector.extract_strided_slice %0 {offsets = [1, 0, 0], sizes = [1, 14, 128], strides = [1, 1, 1]} : vector<3x14x128xf32> to vector<1x14x128xf32>
    %90 = vector.shape_cast %89 : vector<1x14x128xf32> to vector<14x128xf32>
    %91 = arith.mulf %88, %90 : vector<14x128xf32>
    %92 = arith.addf %84, %91 : vector<14x128xf32>
    %93 = vector.extract_strided_slice %1 {offsets = [2, 2, 0], sizes = [1, 1, 128], strides = [1, 1, 1]} : vector<3x3x128xf32> to vector<1x1x128xf32>
    %94 = vector.shape_cast %93 : vector<1x1x128xf32> to vector<1x128xf32>
    %95 = vector.broadcast %94 : vector<1x128xf32> to vector<14x128xf32>
    %96 = arith.mulf %95, %70 : vector<14x128xf32>
    %97 = vector.extract_strided_slice %0 {offsets = [2, 0, 0], sizes = [1, 14, 128], strides = [1, 1, 1]} : vector<3x14x128xf32> to vector<1x14x128xf32>
    %98 = vector.shape_cast %97 : vector<1x14x128xf32> to vector<14x128xf32>
    %99 = arith.mulf %96, %98 : vector<14x128xf32>
    %100 = arith.addf %92, %99 : vector<14x128xf32>
    %101 = tpu.iota {dimensions = array<i32: 0>} : vector<14x128xi32>
    %c1_i32 = arith.constant 1 : i32
    %102 = vector.broadcast %c1_i32 : i32 to vector<14x128xi32>
    %103 = arith.cmpi sge, %101, %102 : vector<14x128xi32>
    %104 = vector.broadcast %3 : vector<1x128xi32> to vector<14x128xi32>
    %105 = arith.cmpi sle, %101, %104 : vector<14x128xi32>
    %106 = arith.andi %103, %105 : vector<14x128xi1>
    %cst_12 = arith.constant 0x7F800000 : f32
    %107 = vector.broadcast %cst_12 : f32 to vector<14x128xf32>
    %108 = arith.select %106, %100, %107 : vector<14x128xi1>, vector<14x128xf32>
    %cst_13 = arith.constant dense<0x7F800000> : vector<128xf32>
    %109 = vector.multi_reduction <minimumf>, %108, %cst_13 [0] : vector<14x128xf32> to vector<128xf32>
    %110 = vector.shape_cast %109 : vector<128xf32> to vector<1x128xf32>
    %111 = vector.broadcast %110 : vector<1x128xf32> to vector<14x128xf32>
    %112 = arith.cmpf oeq, %108, %111 : vector<14x128xf32>
    %c14_i32 = arith.constant 14 : i32
    %113 = vector.broadcast %c14_i32 : i32 to vector<14x128xi32>
    %114 = arith.select %112, %101, %113 : vector<14x128xi1>, vector<14x128xi32>
    %cst_14 = arith.constant dense<2147483647> : vector<128xi32>
    %115 = vector.multi_reduction <minsi>, %114, %cst_14 [0] : vector<14x128xi32> to vector<128xi32>
    %116 = vector.shape_cast %115 : vector<128xi32> to vector<1x128xi32>
    %117 = arith.sitofp %3 : vector<1x128xi32> to vector<1x128xf32>
    %118 = arith.sitofp %116 : vector<1x128xi32> to vector<1x128xf32>
    %cst_15 = arith.constant 1.000000e+00 : f32
    %119 = vector.broadcast %cst_15 : f32 to vector<1x128xf32>
    %120 = arith.subf %118, %119 : vector<1x128xf32>
    %cst_16 = arith.constant 1.000000e+00 : f32
    %121 = vector.broadcast %cst_16 : f32 to vector<1x128xf32>
    %122 = arith.subf %117, %121 : vector<1x128xf32>
    %123 = arith.divf %120, %122 : vector<1x128xf32>
    %cst_17 = arith.constant 1.000000e+00 : f32
    %124 = vector.broadcast %cst_17 : f32 to vector<1x128xf32>
    %125 = arith.addf %123, %124 : vector<1x128xf32>
    %c0_18 = arith.constant 0 : index
    %c0_19 = arith.constant 0 : index
    %126 = vector.load %arg5[%c0_18, %c0_19] : memref<1x128xf32, #tpu.memory_space<vmem>>, vector<1x128xf32>
    tpu.vector_store %arg5[%c0_18, %c0_19], %125 {strides = array<i32>} : memref<1x128xf32, #tpu.memory_space<vmem>>, vector<1x128xf32>,
    return
  }
  func.func @transform_0(%arg0: i32) -> (i32, i32, i32) {
    %c0_i32 = arith.constant 0 : i32
    %c0_i32_0 = arith.constant 0 : i32
    %c0_i32_1 = arith.constant 0 : i32
    return %c0_i32, %c0_i32_0, %arg0 : i32, i32, i32
  }
  func.func @transform_1(%arg0: i32) -> (i32, i32, i32) {
    %c0_i32 = arith.constant 0 : i32
    %c0_i32_0 = arith.constant 0 : i32
    %c0_i32_1 = arith.constant 0 : i32
    return %c0_i32, %c0_i32_0, %arg0 : i32, i32, i32
  }
  func.func @transform_2(%arg0: i32) -> (i32, i32) {
    %c0_i32 = arith.constant 0 : i32
    %c0_i32_0 = arith.constant 0 : i32
    return %c0_i32, %arg0 : i32, i32
  }
  func.func @transform_3(%arg0: i32) -> (i32, i32) {
    %c0_i32 = arith.constant 0 : i32
    %c0_i32_0 = arith.constant 0 : i32
    return %c0_i32, %arg0 : i32, i32
  }
  func.func @transform_4(%arg0: i32) -> (i32, i32) {
    %c0_i32 = arith.constant 0 : i32
    %c0_i32_0 = arith.constant 0 : i32
    return %c0_i32, %arg0 : i32, i32
  }
}

</mosaic_0001>

<llo_original>
// kernel: tpu_custom_call.1
$region0: #{tpu_custom_call.1}
  #allocation0 [shape = 'u32[]', space=smem, size = 0x4, offset = 0x4, fixed_abs, tag = 'smem constant byte address 0x4 - core index']
  #allocation1 [shape = 'u32[144,128]{1,0:T(1,128)}', space=vmem, size = 0x12000, scoped, tag = 'internal scratch']
  %s0 = inlined_call_operand.hbm [shape: f32[3,14,384], index: 0, kind: input, shape index: {}]
  %s1 = inlined_call_operand.hbm [shape: f32[3,3,384], index: 1, kind: input, shape index: {}]
  %s2 = inlined_call_operand.hbm [shape: f32[3,384], index: 2, kind: input, shape index: {}]
  %s3 = inlined_call_operand.vmem [shape: s32[1,384], index: 3, kind: input, shape index: {}]
  %s4 = inlined_call_operand.hbm [shape: f32[1,384], index: 4, kind: output, shape index: {}]
  %s5 = sld [smem:[#allocation0]]
  $region61: #{tpu_custom_call.1} parent=0
    _
  %s7 = ssub.s32 1, %s5
  %s8 = scalar_select 0, %s7, %s5
  $region1: #{tpu_custom_call.1} parent=0
    #allocation2 [shape = 'u8[49152]{0}', space=vmem, size = 0xc000, scoped, tag = 'input window, operand 0']
    #allocation3 [shape = 's32[2]{0}', space=sflag, size = 0x8, scoped, tag = 'scoped memory for tpu_custom_call.1']
    #allocation4 [shape = 's32[2]{0}', space=sflag, size = 0x8, scoped, tag = 'scoped memory for tpu_custom_call.1']
    #allocation5 [shape = 'u8[12288]{0}', space=vmem, size = 0x3000, scoped, tag = 'input window, operand 1']
    #allocation6 [shape = 's32[2]{0}', space=sflag, size = 0x8, scoped, tag = 'scoped memory for tpu_custom_call.1']
    #allocation7 [shape = 'u8[4096]{0}', space=vmem, size = 0x1000, scoped, tag = 'input window, operand 2']
    #allocation8 [shape = 'u8[1024]{0}', space=vmem, size = 0x400, scoped, tag = 'output window, operand 0']
    %9 = vsyncpa [#allocation3], 0
    %s10 = scalar_lea.sflag [#allocation3], 1
    %11 = vsyncpa %s10, 0
    %12 = vsyncpa [#allocation6], 0
    %s13 = scalar_lea.sflag [#allocation6], 1
    %14 = vsyncpa %s13, 0
    %15 = vsyncpa [#allocation4], 0
    %s16 = scalar_lea.sflag [#allocation4], 1
    %17 = vsyncpa %s16, 0
    loop: start=0, step=1, limit=5
    $region2: #{tpu_custom_call.1} parent=1 // loop_pre_header
      _
    $region3: #{tpu_custom_call.1} parent=1 // loop_header
      %s19 = sphi 0, %s23
      %p20 = scmp.ge.s32.totalorder %s19, 5
      %s29 = sphi 0, %s31
      %s32 = sphi 0, %s29
      %s33 = sphi 0, %s32
      %s49 = sphi 0, %s33
      %s55 = sphi 0, %s57
      %s58 = sphi 0, %s55
      %s59 = sphi 0, %s58
      %s75 = sphi 0, %s59
      %s81 = sphi 0, %s83
      %s84 = sphi 0, %s81
      %s85 = sphi 0, %s84
      %s101 = sphi 0, %s85
      %s107 = sphi 0, %s109
      %s110 = sphi 0, %s107
      %s111 = sphi 0, %s110
      %s127 = sphi 0, %s111
      %s133 = sphi 0, %s135
      %s136 = sphi 0, %s133
      %s137 = sphi 0, %s136
      %s153 = sphi 0, %s137
    $region4: #{tpu_custom_call.1} parent=1 // loop_header_branch
      %22 = sbr.rel (%p20) target = $region8
    $region5: #{tpu_custom_call.1} parent=1 // loop_body
      %s24 = ssub.s32 %s19, 1
      %s25 = ssub.s32 %s19, 2
      %s26 = sadd.s32 %s19, 1
      %s27 = ssub.s32 %s19, %s26
      %p28 = scmp.eq.s32.totalorder %s27, 0
      %s30 = sadd.s32 %s29, 1
      %s31 = scalar_select %p28, %s29, %s30
      %p34 = pneg %p28
      %p35 = scmp.eq.s32.totalorder %s19, 2
      %p36 = por %p34, %p35
      %p37 = scmp.ne.s32.totalorder %s29, %s32
      %p38 = scmp.eq.s32.totalorder %s19, 0
      %p39 = por %p37, %p38
      %p40 = scmp.ne.s32.totalorder %s29, %s32
      %p41 = scmp.eq.s32.totalorder %s24, 2
      %p42 = por %p40, %p41
      %p43 = scmp.ne.s32.totalorder %s32, %s33
      %p44 = scmp.eq.s32.totalorder %s24, 0
      %p45 = por %p43, %p44
      %p46 = scmp.ne.s32.totalorder %s32, %s33
      %p47 = scmp.eq.s32.totalorder %s25, 2
      %p48 = por %p46, %p47
      %p50 = scmp.ne.s32.totalorder %s33, %s49
      %p51 = scmp.eq.s32.totalorder %s25, 0
      %p52 = por %p50, %p51
      %s53 = ssub.s32 %s19, %s26
      %p54 = scmp.eq.s32.totalorder %s53, 0
      %s56 = sadd.s32 %s55, 1
      %s57 = scalar_select %p54, %s55, %s56
      %p60 = pneg %p54
      %p61 = scmp.eq.s32.totalorder %s19, 2
      %p62 = por %p60, %p61
      %p63 = scmp.ne.s32.totalorder %s55, %s58
      %p64 = scmp.eq.s32.totalorder %s19, 0
      %p65 = por %p63, %p64
      %p66 = scmp.ne.s32.totalorder %s55, %s58
      %p67 = scmp.eq.s32.totalorder %s24, 2
      %p68 = por %p66, %p67
      %p69 = scmp.ne.s32.totalorder %s58, %s59
      %p70 = scmp.eq.s32.totalorder %s24, 0
      %p71 = por %p69, %p70
      %p72 = scmp.ne.s32.totalorder %s58, %s59
      %p73 = scmp.eq.s32.totalorder %s25, 2
      %p74 = por %p72, %p73
      %p76 = scmp.ne.s32.totalorder %s59, %s75
      %p77 = scmp.eq.s32.totalorder %s25, 0
      %p78 = por %p76, %p77
      %s79 = ssub.s32 %s19, %s26
      %p80 = scmp.eq.s32.totalorder %s79, 0
      %s82 = sadd.s32 %s81, 1
      %s83 = scalar_select %p80, %s81, %s82
      %p86 = pneg %p80
      %p87 = scmp.eq.s32.totalorder %s19, 2
      %p88 = por %p86, %p87
      %p89 = scmp.ne.s32.totalorder %s81, %s84
      %p90 = scmp.eq.s32.totalorder %s19, 0
      %p91 = por %p89, %p90
      %p92 = scmp.ne.s32.totalorder %s81, %s84
      %p93 = scmp.eq.s32.totalorder %s24, 2
      %p94 = por %p92, %p93
      %p95 = scmp.ne.s32.totalorder %s84, %s85
      %p96 = scmp.eq.s32.totalorder %s24, 0
      %p97 = por %p95, %p96
      %p98 = scmp.ne.s32.totalorder %s84, %s85
      %p99 = scmp.eq.s32.totalorder %s25, 2
      %p100 = por %p98, %p99
      %p102 = scmp.ne.s32.totalorder %s85, %s101
      %p103 = scmp.eq.s32.totalorder %s25, 0
      %p104 = por %p102, %p103
      %s105 = ssub.s32 %s19, %s26
      %p106 = scmp.eq.s32.totalorder %s105, 0
      %s108 = sadd.s32 %s107, 1
      %s109 = scalar_select %p106, %s107, %s108
      %p112 = pneg %p106
      %p113 = scmp.eq.s32.totalorder %s19, 2
      %p114 = por %p112, %p113
      %p115 = scmp.ne.s32.totalorder %s107, %s110
      %p116 = scmp.eq.s32.totalorder %s19, 0
      %p117 = por %p115, %p116
      %p118 = scmp.ne.s32.totalorder %s107, %s110
      %p119 = scmp.eq.s32.totalorder %s24, 2
      %p120 = por %p118, %p119
      %p121 = scmp.ne.s32.totalorder %s110, %s111
      %p122 = scmp.eq.s32.totalorder %s24, 0
      %p123 = por %p121, %p122
      %p124 = scmp.ne.s32.totalorder %s110, %s111
      %p125 = scmp.eq.s32.totalorder %s25, 2
      %p126 = por %p124, %p125
      %p128 = scmp.ne.s32.totalorder %s111, %s127
      %p129 = scmp.eq.s32.totalorder %s25, 0
      %p130 = por %p128, %p129
      %s131 = ssub.s32 %s19, %s26
      %p132 = scmp.eq.s32.totalorder %s131, 0
      %s134 = sadd.s32 %s133, 1
      %s135 = scalar_select %p132, %s133, %s134
      %p138 = pneg %p132
      %p139 = scmp.eq.s32.totalorder %s19, 2
      %p140 = por %p138, %p139
      %p141 = scmp.ne.s32.totalorder %s133, %s136
      %p142 = scmp.eq.s32.totalorder %s19, 0
      %p143 = por %p141, %p142
      %p144 = scmp.ne.s32.totalorder %s133, %s136
      %p145 = scmp.eq.s32.totalorder %s24, 2
      %p146 = por %p144, %p145
      %p147 = scmp.ne.s32.totalorder %s136, %s137
      %p148 = scmp.eq.s32.totalorder %s24, 0
      %p149 = por %p147, %p148
      %p150 = scmp.ne.s32.totalorder %s136, %s137
      %p151 = scmp.eq.s32.totalorder %s25, 2
      %p152 = por %p150, %p151
      %p154 = scmp.ne.s32.totalorder %s137, %s153
      %p155 = scmp.eq.s32.totalorder %s25, 0
      %p156 = por %p154, %p155
      %p157 = scmp.le.s32.totalorder 1, %s19
      %p158 = scmp.lt.s32.totalorder %s19, 4
      %p159 = pnand %p157, %p158
      %p160 = pneg %p159
      // Predicated region
      $region9: #{tpu_custom_call.1} parent=5 // pred_check
        _
      $region10: #{tpu_custom_call.1} parent=5 // pred_check_branch
        %162 = sbr.rel (%p159) target = $region12
      $region11: #{tpu_custom_call.1} parent=5 // pred_region
        %s163 = ssub.s32 %s19, 1
      $region12: #{tpu_custom_call.1} parent=5 // pred_fallthru
        _
      %p164 = scmp.lt.s32.totalorder %s19, 3
      // Predicated region
      $region13: #{tpu_custom_call.1} parent=5 // pred_check
        %p165 = pneg %p164
      $region14: #{tpu_custom_call.1} parent=5 // pred_check_branch
        %167 = sbr.rel (%p165) target = $region16
      $region15: #{tpu_custom_call.1} parent=5 // pred_region
        // Predicated region
        $region17: #{tpu_custom_call.1} parent=15 // pred_check
          %p168 = pneg %p39
        $region18: #{tpu_custom_call.1} parent=15 // pred_check_branch
          %170 = sbr.rel (%p168) target = $region20
        $region19: #{tpu_custom_call.1} parent=15 // pred_region
          %s171 = sand.u32 %s29, 1
          %s172 = scalar_lea.sflag [#allocation3], %s171
          %s173 = sand.u32 %s29, 1
          %s174 = smul.addr %s173, 48
          %s175 = scalar_lea.vmem [#allocation2], %s174
          %s177 = ssub.s32 768, 768
          %178 = vsyncadd %s172, %s177
          %s179 = smul.addr %s19, 128
          %s180 = scalar_lea.hbm %s0, %s179
          %s181 = sshll.u32 %s175, 4
          %s182 = int_to_ptr.vmem [resolvable:$true] %s181
          %187 = dma.hbm_to_vmem [thread:$0]  %s180, 768, %s182, %s172, 384, 128, 8
        $region20: #{tpu_custom_call.1} parent=15 // pred_fallthru
          _
        // Predicated region
        $region21: #{tpu_custom_call.1} parent=15 // pred_check
          %p188 = pneg %p65
        $region22: #{tpu_custom_call.1} parent=15 // pred_check_branch
          %190 = sbr.rel (%p188) target = $region24
        $region23: #{tpu_custom_call.1} parent=15 // pred_region
          %s191 = sand.u32 %s19, 1
          %s192 = scalar_lea.sflag [#allocation6], %s191
          %s193 = sand.u32 %s55, 1
          %s194 = smul.addr %s193, 12
          %s195 = scalar_lea.vmem [#allocation5], %s194
          %s197 = ssub.s32 192, 192
          %198 = vsyncadd %s192, %s197
          %s199 = smul.addr %s19, 64
          %s200 = scalar_lea.hbm %s1, %s199
          %s201 = sshll.u32 %s195, 4
          %s202 = int_to_ptr.vmem [resolvable:$true] %s201
          %207 = dma.hbm_to_vmem [thread:$0]  %s200, 192, %s202, %s192, 192, 64, 4
        $region24: #{tpu_custom_call.1} parent=15 // pred_fallthru
          _
        // Predicated region
        $region25: #{tpu_custom_call.1} parent=15 // pred_check
          %p208 = pneg %p91
        $region26: #{tpu_custom_call.1} parent=15 // pred_check_branch
          %210 = sbr.rel (%p208) target = $region28
        $region27: #{tpu_custom_call.1} parent=15 // pred_region
          %s211 = sand.u32 %s19, 1
          %s212 = scalar_lea.sflag [#allocation6], %s211
          %s213 = sand.u32 %s81, 1
          %s214 = smul.addr %s213, 4
          %s215 = scalar_lea.vmem [#allocation7], %s214
          %s217 = ssub.s32 64, 64
          %218 = vsyncadd %s212, %s217
          %s219 = smul.addr %s19, 64
          %s220 = scalar_lea.hbm %s2, %s219
          %s222 = sshll.u32 %s215, 4
          %s223 = int_to_ptr.vmem [resolvable:$true] %s222
          %225 = dma.hbm_to_vmem [thread:$0]  %s220, 64, %s223, %s212
        $region28: #{tpu_custom_call.1} parent=15 // pred_fallthru
          _
        // Predicated region
        $region29: #{tpu_custom_call.1} parent=15 // pred_check
          %p226 = pneg %p117
        $region30: #{tpu_custom_call.1} parent=15 // pred_check_branch
          %228 = sbr.rel (%p226) target = $region32
        $region31: #{tpu_custom_call.1} parent=15 // pred_region
          %p229 = scmp.lt.s32.totalorder %s19, 2
          %s230 = scalar_select %p229, %s19, 2
          %s231 = scalar_lea.vmem %s3, %s230
        $region32: #{tpu_custom_call.1} parent=15 // pred_fallthru
          _
      $region16: #{tpu_custom_call.1} parent=5 // pred_fallthru
        _
      %p232 = scmp.le.s32.totalorder 1, %s19
      %p233 = scmp.lt.s32.totalorder %s19, 4
      %p234 = pnand %p232, %p233
      %p235 = pneg %p234
      // Predicated region
      $region33: #{tpu_custom_call.1} parent=5 // pred_check
        _
      $region34: #{tpu_custom_call.1} parent=5 // pred_check_branch
        %237 = sbr.rel (%p234) target = $region36
      $region35: #{tpu_custom_call.1} parent=5 // pred_region
        %s238 = ssub.s32 %s19, 1
        %s239 = sand.u32 %s32, 1
        %s240 = scalar_lea.sflag [#allocation3], %s239
        %s241 = sand.u32 %s32, 1
        %s242 = smul.addr %s241, 48
        %s243 = scalar_lea.vmem [#allocation2], %s242
        // Predicated region
        $region37: #{tpu_custom_call.1} parent=35 // pred_check
          %p244 = pneg %p45
        $region38: #{tpu_custom_call.1} parent=35 // pred_check_branch
          %246 = sbr.rel (%p244) target = $region40
        $region39: #{tpu_custom_call.1} parent=35 // pred_region
          %247 = dma.done %s240, 768
        $region40: #{tpu_custom_call.1} parent=35 // pred_fallthru
          _
        %s248 = sand.u32 %s24, 1
        %s249 = scalar_lea.sflag [#allocation6], %s248
        %s250 = sand.u32 %s58, 1
        %s251 = smul.addr %s250, 12
        %s252 = scalar_lea.vmem [#allocation5], %s251
        // Predicated region
        $region41: #{tpu_custom_call.1} parent=35 // pred_check
          %p253 = pneg %p71
        $region42: #{tpu_custom_call.1} parent=35 // pred_check_branch
          %255 = sbr.rel (%p253) target = $region44
        $region43: #{tpu_custom_call.1} parent=35 // pred_region
          %256 = dma.done %s249, 192
        $region44: #{tpu_custom_call.1} parent=35 // pred_fallthru
          _
        %s257 = sand.u32 %s24, 1
        %s258 = scalar_lea.sflag [#allocation6], %s257
        %s259 = sand.u32 %s84, 1
        %s260 = smul.addr %s259, 4
        %s261 = scalar_lea.vmem [#allocation7], %s260
        // Predicated region
        $region45: #{tpu_custom_call.1} parent=35 // pred_check
          %p262 = pneg %p97
        $region46: #{tpu_custom_call.1} parent=35 // pred_check_branch
          %264 = sbr.rel (%p262) target = $region48
        $region47: #{tpu_custom_call.1} parent=35 // pred_region
          %265 = dma.done %s258, 64
        $region48: #{tpu_custom_call.1} parent=35 // pred_fallthru
          _
        %s266 = sand.u32 %s32, 1
        %s267 = scalar_lea.sflag [#allocation3], %s266
        %s268 = sand.u32 %s32, 1
        %s269 = smul.addr %s268, 48
        %s270 = scalar_lea.vmem [#allocation2], %s269
        %p271 = pneg %p45
        %p272 = pneg %p42
        %s273 = sand.u32 %s24, 1
        %s274 = scalar_lea.sflag [#allocation6], %s273
        %s275 = sand.u32 %s58, 1
        %s276 = smul.addr %s275, 12
        %s277 = scalar_lea.vmem [#allocation5], %s276
        %p278 = pneg %p71
        %p279 = pneg %p68
        %s280 = sand.u32 %s24, 1
        %s281 = scalar_lea.sflag [#allocation6], %s280
        %s282 = sand.u32 %s84, 1
        %s283 = smul.addr %s282, 4
        %s284 = scalar_lea.vmem [#allocation7], %s283
        %p285 = pneg %p97
        %p286 = pneg %p94
        %p287 = scmp.lt.s32.totalorder %s24, 2
        %s288 = scalar_select %p287, %s24, 2
        %s289 = scalar_lea.vmem %s3, %s288
        %p290 = pneg %p123
        %p291 = pneg %p120
        %p292 = pneg %p149
        %p293 = pneg %p146
        %s294 = sand.u32 %s136, 1
        %s295 = scalar_lea.sflag [#allocation4], %s294
        %s296 = sand.u32 %s136, 1
        %s297 = scalar_lea.vmem [#allocation8], %s296
        %p298 = scmp.lt.s32.totalorder %s24, 2
        %s299 = scalar_select %p298, %s24, 2
        %s300 = scalar_lea.vmem %s3, %s299
        %v301 = vld [vmem:[%s243] sm:$0xff]
        %v302 = vld [vmem:[%s243 + $0x8] sm:$0x3f]
        %v303 = vld [vmem:[%s243 + $0x10] sm:$0xff]
        %v304 = vld [vmem:[%s243 + $0x18] sm:$0x3f]
        %v305 = vld [vmem:[%s243 + $0x20] sm:$0xff]
        %v306 = vld [vmem:[%s243 + $0x28] sm:$0x3f]
        %v307 = vld [vmem:[%s252] sm:$0x7]
        %v308 = vld [vmem:[%s252 + $0x4] sm:$0x7]
        %v309 = vld [vmem:[%s252 + $0x8] sm:$0x7]
        %v310 = vld [vmem:[%s261] sm:$0x7]
        %v311 = vld [vmem:[%s300] sm:$0x1]
        %v312 = vmul.f32 %v310, 2.0
        %v313 = vlaneseq
        %v314 = vshrl.u32 %v313, 7
        %v315 = vsub.s32 0, %v314
        %v316 = vrot.slane %v312, %v315
        %v317 = vmul.f32 %v316, %v301
        %v318 = vmul.f32 %v316, %v302
        %v319 = vsub.f32 0.0, %v317
        %v320 = vsub.f32 0.0, %v318
        %v321 = vlaneseq
        %v322 = vshrl.u32 %v321, 7
        %v323 = vsub.s32 0, %v322
        %v324 = vrot.slane %v307, %v323
        %v325 = vmul.f32 %v324, %v301
        %v326 = vmul.f32 %v324, %v302
        %v327 = vmul.f32 %v325, %v301
        %v328 = vmul.f32 %v326, %v302
        %v329 = vadd.f32 %v319, %v327
        %v330 = vadd.f32 %v320, %v328
        %v331 = vlaneseq
        %v332 = vshrl.u32 %v331, 7
        %v333 = vsub.s32 1, %v332
        %v334 = vrot.slane %v307, %v333
        %v335 = vmul.f32 %v334, %v301
        %v336 = vmul.f32 %v334, %v302
        %v337 = vmul.f32 %v335, %v303
        %v338 = vmul.f32 %v336, %v304
        %v339 = vadd.f32 %v329, %v337
        %v340 = vadd.f32 %v330, %v338
        %v341 = vlaneseq
        %v342 = vshrl.u32 %v341, 7
        %v343 = vsub.s32 2, %v342
        %v344 = vrot.slane %v307, %v343
        %v345 = vmul.f32 %v344, %v301
        %v346 = vmul.f32 %v344, %v302
        %v347 = vmul.f32 %v345, %v305
        %v348 = vmul.f32 %v346, %v306
        %v349 = vadd.f32 %v339, %v347
        %v350 = vadd.f32 %v340, %v348
        %v351 = vlaneseq
        %v352 = vshrl.u32 %v351, 7
        %v353 = vsub.s32 1, %v352
        %v354 = vrot.slane %v312, %v353
        %v355 = vmul.f32 %v354, %v303
        %v356 = vmul.f32 %v354, %v304
        %v357 = vsub.f32 %v349, %v355
        %v358 = vsub.f32 %v350, %v356
        %v359 = vlaneseq
        %v360 = vshrl.u32 %v359, 7
        %v361 = vsub.s32 0, %v360
        %v362 = vrot.slane %v308, %v361
        %v363 = vmul.f32 %v362, %v303
        %v364 = vmul.f32 %v362, %v304
        %v365 = vmul.f32 %v363, %v301
        %v366 = vmul.f32 %v364, %v302
        %v367 = vadd.f32 %v357, %v365
        %v368 = vadd.f32 %v358, %v366
        %v369 = vlaneseq
        %v370 = vshrl.u32 %v369, 7
        %v371 = vsub.s32 1, %v370
        %v372 = vrot.slane %v308, %v371
        %v373 = vmul.f32 %v372, %v303
        %v374 = vmul.f32 %v372, %v304
        %v375 = vmul.f32 %v373, %v303
        %v376 = vmul.f32 %v374, %v304
        %v377 = vadd.f32 %v367, %v375
        %v378 = vadd.f32 %v368, %v376
        %v379 = vlaneseq
        %v380 = vshrl.u32 %v379, 7
        %v381 = vsub.s32 2, %v380
        %v382 = vrot.slane %v308, %v381
        %v383 = vmul.f32 %v382, %v303
        %v384 = vmul.f32 %v382, %v304
        %v385 = vmul.f32 %v383, %v305
        %v386 = vmul.f32 %v384, %v306
        %v387 = vadd.f32 %v377, %v385
        %v388 = vadd.f32 %v378, %v386
        %v389 = vlaneseq
        %v390 = vshrl.u32 %v389, 7
        %v391 = vsub.s32 2, %v390
        %v392 = vrot.slane %v312, %v391
        %v393 = vmul.f32 %v392, %v305
        %v394 = vmul.f32 %v392, %v306
        %v395 = vsub.f32 %v387, %v393
        %v396 = vsub.f32 %v388, %v394
        %v397 = vlaneseq
        %v398 = vshrl.u32 %v397, 7
        %v399 = vsub.s32 0, %v398
        %v400 = vrot.slane %v309, %v399
        %v401 = vmul.f32 %v400, %v305
        %v402 = vmul.f32 %v400, %v306
        %v403 = vmul.f32 %v401, %v301
        %v404 = vmul.f32 %v402, %v302
        %v405 = vadd.f32 %v395, %v403
        %v406 = vadd.f32 %v396, %v404
        %v407 = vlaneseq
        %v408 = vshrl.u32 %v407, 7
        %v409 = vsub.s32 1, %v408
        %v410 = vrot.slane %v309, %v409
        %v411 = vmul.f32 %v410, %v305
        %v412 = vmul.f32 %v410, %v306
        %v413 = vmul.f32 %v411, %v303
        %v414 = vmul.f32 %v412, %v304
        %v415 = vadd.f32 %v405, %v413
        %v416 = vadd.f32 %v406, %v414
        %v417 = vlaneseq
        %v418 = vshrl.u32 %v417, 7
        %v419 = vsub.s32 2, %v418
        %v420 = vrot.slane %v309, %v419
        %v421 = vmul.f32 %v420, %v305
        %v422 = vmul.f32 %v420, %v306
        %v423 = vmul.f32 %v421, %v305
        %v424 = vmul.f32 %v422, %v306
        %v425 = vadd.f32 %v415, %v423
        %v426 = vadd.f32 %v416, %v424
        %v427 = vlaneseq
        %v428 = vshrl.u32 %v427, 7
        %v429 = vadd.s32 %v428, 8
        %vm430 = vcmp.ge.s32.totalorder %v428, 1
        %vm431 = vcmp.ge.s32.totalorder %v429, 1
        %v432 = vlaneseq
        %v433 = vshrl.u32 %v432, 7
        %v434 = vsub.s32 0, %v433
        %v435 = vrot.slane %v311, %v434
        %vm436 = vcmp.le.s32.totalorder %v428, %v435
        %vm437 = vcmp.le.s32.totalorder %v429, %v435
        %vm438 = vmand %vm430, %vm436
        %vm439 = vmand %vm431, %vm437
        %v440 = vsel %vm438, %v425, inf
        %v441 = vsel %vm439, %v426, inf
        %vm442 = vcmask 1045504
        %v443 = vsel %vm442, %v441, inf
        %v444 = vmin.f32 %v440, %v443
        %v445 = vrot.slane %v444, 4
        %v446 = vmin.f32 %v444, %v445
        %v447 = vrot.slane %v446, 2
        %v448 = vmin.f32 %v446, %v447
        %v449 = vrot.slane %v448, 1
        %v450 = vmin.f32 %v448, %v449
        %vm451 = vcmp.eq.f32.partialorder %v440, %v450
        %vm452 = vcmp.eq.f32.partialorder %v441, %v450
        %v453 = vsel %vm451, %v428, 14
        %v454 = vsel %vm452, %v429, 14
        %v455 = vsel %vm442, %v454, 2147483647
        %vm456 = vcmp.lt.s32.totalorder %v453, %v455
        %v457 = vsel %vm456, %v453, %v455
        %v458 = vrot.slane %v457, 4
        %vm459 = vcmp.lt.s32.totalorder %v457, %v458
        %v460 = vsel %vm459, %v457, %v458
        %v461 = vrot.slane %v460, 2
        %vm462 = vcmp.lt.s32.totalorder %v460, %v461
        %v463 = vsel %vm462, %v460, %v461
        %v464 = vrot.slane %v463, 1
        %vm465 = vcmp.lt.s32.totalorder %v463, %v464
        %v466 = vsel %vm465, %v463, %v464
        %v467 = vcvt.s32.f32 %v311
        %v468 = vcvt.s32.f32 %v466
        %v469 = vsub.f32 %v468, 1.0
        %v470 = vsub.f32 %v467, 1.0
        %v471 = vrcp.pop %v470
        %v472 = vmul.f32 %v469, %v471
        %v473 = vadd.f32 %v472, 1.0
        %474 = vst [vmem:[%s297] sm:$0x1] %v473
        %s475 = sand.u32 %s136, 1
        %s476 = scalar_lea.sflag [#allocation4], %s475
        %s477 = sand.u32 %s136, 1
        %s478 = scalar_lea.vmem [#allocation8], %s477
        // Predicated region
        $region49: #{tpu_custom_call.1} parent=35 // pred_check
          %p479 = pneg %p146
        $region50: #{tpu_custom_call.1} parent=35 // pred_check_branch
          %481 = sbr.rel (%p479) target = $region52
        $region51: #{tpu_custom_call.1} parent=35 // pred_region
          %s483 = ssub.s32 16, 16
          %484 = vsyncadd %s476, %s483
          %s485 = smul.addr %s24, 16
          %s486 = scalar_lea.hbm %s4, %s485
          %s488 = sshll.u32 %s478, 4
          %s489 = int_to_ptr.vmem [resolvable:$true] %s488
          %491 = dma.vmem_to_hbm [thread:$0]  %s489, 16, %s486, %s476
        $region52: #{tpu_custom_call.1} parent=35 // pred_fallthru
          _
      $region36: #{tpu_custom_call.1} parent=5 // pred_fallthru
        _
      %p492 = scmp.le.s32.totalorder 2, %s19
      // Predicated region
      $region53: #{tpu_custom_call.1} parent=5 // pred_check
        %p493 = pneg %p492
      $region54: #{tpu_custom_call.1} parent=5 // pred_check_branch
        %495 = sbr.rel (%p493) target = $region56
      $region55: #{tpu_custom_call.1} parent=5 // pred_region
        %s496 = ssub.s32 %s19, 2
        // Predicated region
        $region57: #{tpu_custom_call.1} parent=55 // pred_check
          %p497 = pneg %p152
        $region58: #{tpu_custom_call.1} parent=55 // pred_check_branch
          %499 = sbr.rel (%p497) target = $region60
        $region59: #{tpu_custom_call.1} parent=55 // pred_region
          %s500 = sand.u32 %s137, 1
          %s501 = scalar_lea.sflag [#allocation4], %s500
          %s502 = sand.u32 %s137, 1
          %s503 = scalar_lea.vmem [#allocation8], %s502
          %504 = dma.done %s501, 16
        $region60: #{tpu_custom_call.1} parent=55 // pred_fallthru
          _
      $region56: #{tpu_custom_call.1} parent=5 // pred_fallthru
        _
    $region6: #{tpu_custom_call.1} parent=1 // loop_footer
      %s23 = sadd.s32 1, %s19
    $region7: #{tpu_custom_call.1} parent=1 // loop_footer_branch
      %18 = sbr.rel target = $region3
    $region8: #{tpu_custom_call.1} parent=1 // loop_exit
      _
    %505 = vsyncpa [#allocation3], 1
    %s506 = scalar_lea.sflag [#allocation3], 1
    %507 = vsyncpa %s506, 1
    %508 = vsyncpa [#allocation6], 1
    %s509 = scalar_lea.sflag [#allocation6], 1
    %510 = vsyncpa %s509, 1
    %511 = vsyncpa [#allocation4], 1
    %s512 = scalar_lea.sflag [#allocation4], 1
    %513 = vsyncpa %s512, 1

</llo_original>
